<compile_context>
chip_gen: v7x
topology: tpu7x:2x2x1
jax: 0.10.0
libtpu: 0.0.40
codegen_flags: <defaults>
</compile_context>

<pallas_src>
import functools
import math

import numpy as np
import jax
import jax.numpy as jnp
from jax.experimental import pallas as pl
from jax.experimental.pallas import tpu as pltpu


# ---------------------------------------------------------------------------
# Pallas kernel: separable bilinear upsample (align_corners=True) as two MXU
# matmuls + squared error + per-depth-interval counts, one (batch, W-tile)
# slab (all C channels) per grid step.
# ---------------------------------------------------------------------------
def _var_counts_kernel(small_ref, large_ref, wy_ref, wxt_ref,
                       var_ref, counts_ref, *, C, H, boundaries, fuse):
    NB = len(boundaries)                       # NI + 1 interval boundaries
    wy = wy_ref[...]                           # (H, h)  native dtype -> MXU
    wxt = wxt_ref[...]                         # (w, tw) native dtype -> MXU
    dot_dtype = wy.dtype
    tw = wxt.shape[-1]

    if fuse:
        # ---- stage A: per-channel (tiny) Wy @ small_c, stacked along sublanes.
        tmp_all = jnp.concatenate(
            [jnp.dot(wy, small_ref[c], preferred_element_type=jnp.float32)
             for c in range(C)],
            axis=0)                                                # (C*H, w) f32
        # ---- stage B: ONE fused matmul for the w-contraction over all channels.
        interp = jnp.dot(tmp_all.astype(dot_dtype), wxt,
                         preferred_element_type=jnp.float32)       # (C*H, tw) f32

        large_all = large_ref[...].reshape(C * H, tw)              # native dtype
        d = interp - large_all.astype(jnp.float32)
        var_ref[...] = (d * d).astype(var_ref.dtype).reshape(C, H, tw)

        # Threshold (>= boundary) sums on the native-dtype slab: sublane reduce
        # only here; the single cross-lane reduce per boundary happens below.
        part = [jnp.sum((large_all >= boundaries[j]).astype(jnp.float32),
                        axis=0, keepdims=True)                     # (1, tw)
                for j in range(NB)]
    else:
        # Per-channel fallback (C > 1 and H not a multiple of 8: the sublane
        # merge above would force a relayout).
        part = [jnp.zeros((1, tw), jnp.float32) for _ in range(NB)]
        for c in range(C):                     # static unroll, C is small
            small_c = small_ref[c]             # (h, w)  native
            large_c = large_ref[c]             # (H, tw) native
            tmp = jnp.dot(wy, small_c, preferred_element_type=jnp.float32)
            interp = jnp.dot(tmp.astype(dot_dtype), wxt,
                             preferred_element_type=jnp.float32)   # (H, tw) f32
            d = interp - large_c.astype(jnp.float32)
            var_ref[c] = (d * d).astype(var_ref.dtype)
            for j in range(NB):
                part[j] = part[j] + jnp.sum(
                    (large_c >= boundaries[j]).astype(jnp.float32),
                    axis=0, keepdims=True)

    # One cross-lane reduce per boundary, adjacent differences give per-interval
    # counts, and the lane scatter is built exactly once (write-once store).
    cge = [jnp.sum(part[j]) for j in range(NB)]
    lane = jax.lax.broadcasted_iota(jnp.int32, (8, 128), 1)
    acc = jnp.zeros((8, 128), jnp.float32)
    for i in range(NB - 1):
        acc = acc + jnp.where(lane == i, cge[i] - cge[i + 1], 0.0)
    counts_ref[...] = acc


def _interp_matrix(out_size, in_size):
    """Row-interpolation matrix for F.interpolate(mode='bilinear', align_corners=True)."""
    m = np.zeros((out_size, in_size), np.float32)
    for i in range(out_size):
        src = 0.0 if out_size == 1 else i * (in_size - 1) / (out_size - 1)
        i0 = min(int(np.floor(src)), in_size - 1)
        i1 = min(i0 + 1, in_size - 1)
        f = src - i0
        m[i, i0] += 1.0 - f
        m[i, i1] += f
    return m


def _vmem_capacity_bytes():
    """Per-core VMEM capacity; conservative (v7x) fallback if the query fails."""
    try:
        info = pltpu.get_tpu_info()
        cap = int(getattr(info, "vmem_capacity_bytes", 0))
        if cap > 0:
            return cap
    except Exception:
        pass
    return 64 * 1024 * 1024


def _choose_w_tile(W, B, C, H, in_bytes, out_bytes, budget_bytes):
    """Largest lane-dense W tile whose *double-buffered* footprint fits the budget."""
    def footprint(tw):
        blocks = 2 * C * H * tw * (in_bytes + out_bytes)   # x2: double-buffering
        temps = 4 * C * H * tw * 4                          # f32 interp/diff/upcast temps
        return blocks + temps

    if W % 128 != 0:
        # (8,128) rule: a non-multiple-of-128 tile must equal the full dim.
        return W
    cands = sorted({128 * k for k in range(1, W // 128 + 1)
                    if W % (128 * k) == 0}, reverse=True)
    tw = next((c for c in cands if footprint(c) <= budget_bytes), cands[-1])
    # Guarantee >= 2 parallel grid steps when B == 1 (v7x has 2 TensorCores).
    if B == 1 and tw == W and len(cands) > 1:
        tw = cands[1]
    return tw


def _pallas_var_counts(pred_small, pred_large, wy, wxt, boundaries):
    """Returns (variance (B,C,H,W) in pred_large.dtype, counts (B,n_wt,8,128) f32)."""
    B, C, H, W = pred_large.shape
    h, w = pred_small.shape[2], pred_small.shape[3]
    NB = len(boundaries)
    assert 2 <= NB <= 129, NB                  # counts live in one 128-lane row

    out_dtype = pred_large.dtype               # bf16 in -> bf16 variance (halves writes)
    in_bytes = jnp.dtype(pred_large.dtype).itemsize
    out_bytes = jnp.dtype(out_dtype).itemsize

    vmem_cap = _vmem_capacity_bytes()
    vmem_limit = int(vmem_cap * 0.75)          # ~96 MiB v5e/v6e, ~48 MiB v7x
    tile_budget = max(vmem_limit - 8 * 1024 * 1024, 8 * 1024 * 1024)

    tw = _choose_w_tile(W, B, C, H, in_bytes, out_bytes, tile_budget)
    n_wt = W // tw

    fuse = (C == 1) or (H % 8 == 0)
    kernel = functools.partial(
        _var_counts_kernel, C=C, H=H,
        boundaries=tuple(float(v) for v in boundaries), fuse=fuse)

    var, counts = pl.pallas_call(
        kernel,
        out_shape=(
            jax.ShapeDtypeStruct((B, C, H, W), out_dtype),
            jax.ShapeDtypeStruct((B, n_wt, 8, 128), jnp.float32),
        ),
        grid_spec=pltpu.PrefetchScalarGridSpec(
            num_scalar_prefetch=0,
            grid=(B, n_wt),
            in_specs=[
                pl.BlockSpec((pl.Squeezed(), C, h, w),
                             lambda b, wt: (b, 0, 0, 0)),            # pred_small
                pl.BlockSpec((pl.Squeezed(), C, H, tw),
                             lambda b, wt: (b, 0, 0, wt)),           # pred_large (W tile)
                pl.BlockSpec((H, h), lambda b, wt: (0, 0)),          # Wy
                pl.BlockSpec((w, tw), lambda b, wt: (0, wt)),        # Wx^T (column tile)
            ],
            out_specs=[
                pl.BlockSpec((pl.Squeezed(), C, H, tw),
                             lambda b, wt: (b, 0, 0, wt)),           # variance
                pl.BlockSpec((pl.Squeezed(), pl.Squeezed(), 8, 128),
                             lambda b, wt: (b, wt, 0, 0)),           # counts (write-once)
            ],
        ),
        compiler_params=pltpu.CompilerParams(
            dimension_semantics=("parallel", "parallel"),
            vmem_limit_bytes=vmem_limit),
    )(pred_small, pred_large, wy, wxt)
    return var, counts


class CertainSample:
    """JAX/Pallas re-implementation of the PyTorch CertainSample module."""

    def __init__(self, dim, min_depth, max_depth, sample_num):
        self.dim = dim
        self.min_depth = min_depth / max_depth
        self.max_depth = 1.0
        assert sample_num > 0, sample_num
        self.sample_num = sample_num

    def __call__(self, pred_small, pred_large, interval):
        B, C, H, W = pred_large.shape
        h, w = pred_small.shape[2], pred_small.shape[3]

        full_interval = [self.min_depth] + list(interval) + [self.max_depth]
        boundaries = tuple(float(v) for v in full_interval)
        NI = len(boundaries) - 1

        wy = jnp.asarray(_interp_matrix(H, h), dtype=pred_small.dtype)      # (H, h)
        wxt = jnp.asarray(_interp_matrix(W, w).T, dtype=pred_small.dtype)   # (w, W)

        # ---- device: Pallas kernel + on-device top-k (variance stays in HBM) ----
        variance, counts_pad = _pallas_var_counts(
            pred_small, pred_large, wy, wxt, boundaries)

        counts_dev = counts_pad[:, :, 0, :NI].sum(axis=1)                   # (B, NI)
        flat = variance.reshape(B, C * H * W)
        k_full = min(C * self.sample_num, C * H * W)
        # TODO(synk): a per-tile candidate pre-selection inside the kernel would
        # shrink this full-map top_k; kept as a plain on-device lax.top_k here.
        _, top_idx_dev = jax.lax.top_k(flat, k_full)                        # (B, k_full)
        k_fb = min(self.sample_num, H * W)
        # TODO(synk): original uses torch.topk(k=sample_num) and errors when
        # sample_num > H*W; k is clamped to H*W here.
        _, fb_idx_dev = jax.lax.top_k(variance.reshape(B, C, H * W), k_fb)  # (B, C, k_fb)

        counts = np.asarray(jax.block_until_ready(counts_dev))
        top_idx = np.asarray(top_idx_dev)
        fb_idx = np.asarray(fb_idx_dev)

        # ---- host: dynamic-shape coordinate assembly (mirrors PyTorch exactly,
        # including idx // W over the C*H*W flatten and total_depth_num = H*W) ----
        total_depth_num = H * W
        inter_sampled_coors = []
        for b in range(B):
            batch_sampled_coors = []
            already_num = 0
            inter_sampled_num = []
            for i in range(NI):
                inter_total = float(counts[b, i])
                k = int(min(math.floor(inter_total / total_depth_num * self.sample_num),
                            inter_total))
                if k > 0:
                    indx = np.sort(top_idx[b, :k].astype(np.int64))
                    row = indx // W
                    col = indx % W
                    coors = np.stack([col, row])
                    batch_sampled_coors.append(coors)
                    inter_sampled_num.append(coors.shape[-1])
                    already_num += k
            if len(batch_sampled_coors) > 0:
                catted = np.concatenate(batch_sampled_coors, axis=1)
                remain_num = self.sample_num - already_num
            else:
                indx = np.sort(fb_idx[b].astype(np.int64), axis=-1)
                row = indx // W
                col = indx % W
                catted = np.concatenate([col, row], axis=0)
                remain_num = 0
            if remain_num > 0 and remain_num >= already_num:
                copy_times = remain_num // already_num + 1
                catted = np.tile(catted, (1, copy_times))
                remain_num = self.sample_num - already_num * copy_times
            if remain_num > 0:
                copy_coors = catted[:, -remain_num:]
                catted = np.concatenate([catted, copy_coors], axis=1)
            if remain_num < 0:
                maxid = int(np.argmax(np.asarray(inter_sampled_num)))
                batch_sampled_coors[maxid] = batch_sampled_coors[maxid][:, :remain_num]
                catted = np.concatenate(batch_sampled_coors, axis=1)
            inter_sampled_coors.append(catted)

        sampled = np.stack(inter_sampled_coors).astype(np.float32)   # (B, 2, N)
        sampled = np.transpose(sampled, (0, 2, 1))                   # (B, N, 2)
        sampled[:, :, 0] = sampled[:, :, 0] / W * 2 - 1
        sampled[:, :, 1] = sampled[:, :, 1] / H * 2 - 1
        sampled = sampled[:, :, None, :]                             # (B, N, 1, 2)
        return jnp.asarray(sampled)


if __name__ == "__main__":
    B, C, H, W = 2, 1, 16, 16
    h, w = 8, 8
    min_depth, max_depth, sample_num = 0.1, 1.0, 32
    interval = [0.3, 0.6]

    key = jax.random.PRNGKey(0)
    k1, k2, k3, k4 = jax.random.split(key, 4)

    # --- Pallas kernel sanity check (C=4 exercises the channel-fused path) ---
    Ck = 4
    ps_k = jax.random.uniform(k3, (B, Ck, h, w), jnp.float32, minval=0.1, maxval=0.999)
    pl_k = jax.random.uniform(k4, (B, Ck, H, W), jnp.float32, minval=0.1, maxval=0.999)
    full_interval = [min_depth / max_depth] + list(interval) + [1.0]
    boundaries = tuple(float(v) for v in full_interval)
    NI = len(boundaries) - 1
    wy_np = _interp_matrix(H, h)
    wx_np = _interp_matrix(W, w)

    var_dev, cnt_dev = _pallas_var_counts(
        ps_k, pl_k, jnp.asarray(wy_np), jnp.asarray(wx_np.T), boundaries)
    var_dev = np.asarray(jax.block_until_ready(var_dev))
    cnt_dev = np.asarray(jax.block_until_ready(cnt_dev))[:, :, 0, :NI].sum(axis=1)

    ps, plg = np.asarray(ps_k), np.asarray(pl_k)
    interp_ref = np.einsum("Hh,bchw,wW->bcHW", wy_np, ps, wx_np.T)
    var_ref = (interp_ref - plg) ** 2
    cnt_ref = np.stack([
        [np.sum((plg[b] >= np.float32(boundaries[i])) &
                (plg[b] < np.float32(boundaries[i + 1]))) for i in range(NI)]
        for b in range(B)
    ]).astype(np.float32)
    assert np.allclose(var_dev, var_ref, atol=1e-5), "variance mismatch"
    assert np.allclose(cnt_dev, cnt_ref, atol=1e-5), "counts mismatch"

    # --- full forward (depth maps: C=1, matching the module's intended use) ---
    pred_small = jax.random.uniform(k1, (B, C, h, w), jnp.float32,
                                    minval=0.1, maxval=0.999)
    pred_large = jax.random.uniform(k2, (B, C, H, W), jnp.float32,
                                    minval=0.1, maxval=0.999)
    mod = CertainSample(dim=4, min_depth=min_depth, max_depth=max_depth,
                        sample_num=sample_num)
    out = mod(pred_small, pred_large, interval)
    out = jax.block_until_ready(out)
    assert out.shape == (B, sample_num, 1, 2), out.shape
    assert out.dtype == jnp.float32
    print("KERNEL_OK")
</pallas_src>

<mosaic_0001>
module attributes {stable_mosaic.version = 11 : i64} {
  func.func @_var_counts_kernel(%arg0: i32, %arg1: i32, %arg2: memref<1x4x8x8xf32, #tpu.memory_space<vmem>>, %arg3: memref<1x4x16x16xf32, #tpu.memory_space<vmem>>, %arg4: memref<16x8xf32, #tpu.memory_space<vmem>>, %arg5: memref<8x16xf32, #tpu.memory_space<vmem>>, %arg6: memref<1x4x16x16xf32, #tpu.memory_space<vmem>>, %arg7: memref<1x1x8x128xf32, #tpu.memory_space<vmem>>) attributes {dimension_semantics = [#tpu.dimension_semantics<parallel>, #tpu.dimension_semantics<parallel>], iteration_bounds = array<i64: 2, 1>, scalar_prefetch = 0 : i64, scratch_operands = 0 : i64, tpu.core_type = #tpu.core_type<tc>, window_params = [{transform_indices = @transform_0, window_bounds = array<i64: 1, 4, 8, 8>}, {transform_indices = @transform_1, window_bounds = array<i64: 1, 4, 16, 16>}, {pipeline_mode = #tpu.pipeline_mode<synchronous>, transform_indices = @transform_2, window_bounds = array<i64: 16, 8>}, {transform_indices = @transform_3, window_bounds = array<i64: 8, 16>}, {transform_indices = @transform_4, window_bounds = array<i64: 1, 4, 16, 16>}, {transform_indices = @transform_5, window_bounds = array<i64: 1, 1, 8, 128>}]} {
    %c0 = arith.constant 0 : index
    %c0_0 = arith.constant 0 : index
    %0 = vector.load %arg4[%c0, %c0_0] : memref<16x8xf32, #tpu.memory_space<vmem>>, vector<16x8xf32>
    %c0_1 = arith.constant 0 : index
    %c0_2 = arith.constant 0 : index
    %1 = vector.load %arg5[%c0_1, %c0_2] : memref<8x16xf32, #tpu.memory_space<vmem>>, vector<8x16xf32>
    %c0_3 = arith.constant 0 : index
    %c0_4 = arith.constant 0 : index
    %c0_5 = arith.constant 0 : index
    %c0_6 = arith.constant 0 : index
    %2 = vector.load %arg2[%c0_3, %c0_4, %c0_5, %c0_6] : memref<1x4x8x8xf32, #tpu.memory_space<vmem>>, vector<1x1x8x8xf32>
    %3 = vector.shape_cast %2 : vector<1x1x8x8xf32> to vector<8x8xf32>
    %cst = arith.constant dense<0.000000e+00> : vector<16x8xf32>
    %4 = tpu.matmul %0, %3, %cst {dimension_numbers = #tpu.dot_dimension_numbers<[1], [0], [0], [1], [0, 0, 1, 1], [], []>} : vector<16x8xf32>, vector<8x8xf32>, vector<16x8xf32> -> vector<16x8xf32>
    %c0_7 = arith.constant 0 : index
    %c1 = arith.constant 1 : index
    %c0_8 = arith.constant 0 : index
    %c0_9 = arith.constant 0 : index
    %5 = vector.load %arg2[%c0_7, %c1, %c0_8, %c0_9] : memref<1x4x8x8xf32, #tpu.memory_space<vmem>>, vector<1x1x8x8xf32>
    %6 = vector.shape_cast %5 : vector<1x1x8x8xf32> to vector<8x8xf32>
    %cst_10 = arith.constant dense<0.000000e+00> : vector<16x8xf32>
    %7 = tpu.matmul %0, %6, %cst_10 {dimension_numbers = #tpu.dot_dimension_numbers<[1], [0], [0], [1], [0, 0, 1, 1], [], []>} : vector<16x8xf32>, vector<8x8xf32>, vector<16x8xf32> -> vector<16x8xf32>
    %c0_11 = arith.constant 0 : index
    %c2 = arith.constant 2 : index
    %c0_12 = arith.constant 0 : index
    %c0_13 = arith.constant 0 : index
    %8 = vector.load %arg2[%c0_11, %c2, %c0_12, %c0_13] : memref<1x4x8x8xf32, #tpu.memory_space<vmem>>, vector<1x1x8x8xf32>
    %9 = vector.shape_cast %8 : vector<1x1x8x8xf32> to vector<8x8xf32>
    %cst_14 = arith.constant dense<0.000000e+00> : vector<16x8xf32>
    %10 = tpu.matmul %0, %9, %cst_14 {dimension_numbers = #tpu.dot_dimension_numbers<[1], [0], [0], [1], [0, 0, 1, 1], [], []>} : vector<16x8xf32>, vector<8x8xf32>, vector<16x8xf32> -> vector<16x8xf32>
    %c0_15 = arith.constant 0 : index
    %c3 = arith.constant 3 : index
    %c0_16 = arith.constant 0 : index
    %c0_17 = arith.constant 0 : index
    %11 = vector.load %arg2[%c0_15, %c3, %c0_16, %c0_17] : memref<1x4x8x8xf32, #tpu.memory_space<vmem>>, vector<1x1x8x8xf32>
    %12 = vector.shape_cast %11 : vector<1x1x8x8xf32> to vector<8x8xf32>
    %cst_18 = arith.constant dense<0.000000e+00> : vector<16x8xf32>
    %13 = tpu.matmul %0, %12, %cst_18 {dimension_numbers = #tpu.dot_dimension_numbers<[1], [0], [0], [1], [0, 0, 1, 1], [], []>} : vector<16x8xf32>, vector<8x8xf32>, vector<16x8xf32> -> vector<16x8xf32>
    %14 = tpu.concatenate %4, %7, %10, %13 in 0 : vector<16x8xf32>, vector<16x8xf32>, vector<16x8xf32>, vector<16x8xf32> -> vector<64x8xf32>
    %cst_19 = arith.constant dense<0.000000e+00> : vector<64x16xf32>
    %15 = tpu.matmul %14, %1, %cst_19 {dimension_numbers = #tpu.dot_dimension_numbers<[1], [0], [0], [1], [0, 0, 1, 1], [], []>} : vector<64x8xf32>, vector<8x16xf32>, vector<64x16xf32> -> vector<64x16xf32>
    %c0_20 = arith.constant 0 : index
    %c0_21 = arith.constant 0 : index
    %c0_22 = arith.constant 0 : index
    %c0_23 = arith.constant 0 : index
    %16 = vector.load %arg3[%c0_20, %c0_21, %c0_22, %c0_23] : memref<1x4x16x16xf32, #tpu.memory_space<vmem>>, vector<1x4x16x16xf32>
    %17 = vector.shape_cast %16 : vector<1x4x16x16xf32> to vector<4x16x16xf32>
    %18 = vector.shape_cast %17 : vector<4x16x16xf32> to vector<64x16xf32>
    %19 = arith.subf %15, %18 : vector<64x16xf32>
    %20 = arith.mulf %19, %19 : vector<64x16xf32>
    %21 = vector.shape_cast %20 : vector<64x16xf32> to vector<4x16x16xf32>
    %c0_24 = arith.constant 0 : index
    %c0_25 = arith.constant 0 : index
    %c0_26 = arith.constant 0 : index
    %c0_27 = arith.constant 0 : index
    %22 = vector.load %arg6[%c0_24, %c0_25, %c0_26, %c0_27] : memref<1x4x16x16xf32, #tpu.memory_space<vmem>>, vector<1x4x16x16xf32>
    %23 = vector.shape_cast %22 : vector<1x4x16x16xf32> to vector<4x16x16xf32>
    %24 = vector.shape_cast %21 : vector<4x16x16xf32> to vector<1x4x16x16xf32>
    tpu.vector_store %arg6[%c0_24, %c0_25, %c0_26, %c0_27], %24 {strides = array<i32>} : memref<1x4x16x16xf32, #tpu.memory_space<vmem>>, vector<1x4x16x16xf32>,
    %cst_28 = arith.constant 1.000000e-01 : f32
    %25 = vector.broadcast %cst_28 : f32 to vector<64x16xf32>
    %26 = arith.cmpf oge, %18, %25 : vector<64x16xf32>
    %27 = arith.extui %26 : vector<64x16xi1> to vector<64x16xi32>
    %28 = arith.sitofp %27 : vector<64x16xi32> to vector<64x16xf32>
    %cst_29 = arith.constant dense<0.000000e+00> : vector<16xf32>
    %29 = vector.multi_reduction <add>, %28, %cst_29 [0] : vector<64x16xf32> to vector<16xf32>
    %30 = vector.shape_cast %29 : vector<16xf32> to vector<1x16xf32>
    %cst_30 = arith.constant 3.000000e-01 : f32
    %31 = vector.broadcast %cst_30 : f32 to vector<64x16xf32>
    %32 = arith.cmpf oge, %18, %31 : vector<64x16xf32>
    %33 = arith.extui %32 : vector<64x16xi1> to vector<64x16xi32>
    %34 = arith.sitofp %33 : vector<64x16xi32> to vector<64x16xf32>
    %cst_31 = arith.constant dense<0.000000e+00> : vector<16xf32>
    %35 = vector.multi_reduction <add>, %34, %cst_31 [0] : vector<64x16xf32> to vector<16xf32>
    %36 = vector.shape_cast %35 : vector<16xf32> to vector<1x16xf32>
    %cst_32 = arith.constant 6.000000e-01 : f32
    %37 = vector.broadcast %cst_32 : f32 to vector<64x16xf32>
    %38 = arith.cmpf oge, %18, %37 : vector<64x16xf32>
    %39 = arith.extui %38 : vector<64x16xi1> to vector<64x16xi32>
    %40 = arith.sitofp %39 : vector<64x16xi32> to vector<64x16xf32>
    %cst_33 = arith.constant dense<0.000000e+00> : vector<16xf32>
    %41 = vector.multi_reduction <add>, %40, %cst_33 [0] : vector<64x16xf32> to vector<16xf32>
    %42 = vector.shape_cast %41 : vector<16xf32> to vector<1x16xf32>
    %cst_34 = arith.constant 1.000000e+00 : f32
    %43 = vector.broadcast %cst_34 : f32 to vector<64x16xf32>
    %44 = arith.cmpf oge, %18, %43 : vector<64x16xf32>
    %45 = arith.extui %44 : vector<64x16xi1> to vector<64x16xi32>
    %46 = arith.sitofp %45 : vector<64x16xi32> to vector<64x16xf32>
    %cst_35 = arith.constant dense<0.000000e+00> : vector<16xf32>
    %47 = vector.multi_reduction <add>, %46, %cst_35 [0] : vector<64x16xf32> to vector<16xf32>
    %48 = vector.shape_cast %47 : vector<16xf32> to vector<1x16xf32>
    %49 = vector.shape_cast %30 : vector<1x16xf32> to vector<1x1x16xf32>
    %cst_36 = arith.constant dense<0.000000e+00> : vector<1xf32>
    %50 = vector.multi_reduction <add>, %49, %cst_36 [1, 2] : vector<1x1x16xf32> to vector<1xf32>
    %51 = vector.shape_cast %50 : vector<1xf32> to vector<1x1x1xf32>
    %52 = vector.extract %51[0, 0, 0] : f32 from vector<1x1x1xf32>
    %53 = vector.shape_cast %36 : vector<1x16xf32> to vector<1x1x16xf32>
    %cst_37 = arith.constant dense<0.000000e+00> : vector<1xf32>
    %54 = vector.multi_reduction <add>, %53, %cst_37 [1, 2] : vector<1x1x16xf32> to vector<1xf32>
    %55 = vector.shape_cast %54 : vector<1xf32> to vector<1x1x1xf32>
    %56 = vector.extract %55[0, 0, 0] : f32 from vector<1x1x1xf32>
    %57 = vector.shape_cast %42 : vector<1x16xf32> to vector<1x1x16xf32>
    %cst_38 = arith.constant dense<0.000000e+00> : vector<1xf32>
    %58 = vector.multi_reduction <add>, %57, %cst_38 [1, 2] : vector<1x1x16xf32> to vector<1xf32>
    %59 = vector.shape_cast %58 : vector<1xf32> to vector<1x1x1xf32>
    %60 = vector.extract %59[0, 0, 0] : f32 from vector<1x1x1xf32>
    %61 = vector.shape_cast %48 : vector<1x16xf32> to vector<1x1x16xf32>
    %cst_39 = arith.constant dense<0.000000e+00> : vector<1xf32>
    %62 = vector.multi_reduction <add>, %61, %cst_39 [1, 2] : vector<1x1x16xf32> to vector<1xf32>
    %63 = vector.shape_cast %62 : vector<1xf32> to vector<1x1x1xf32>
    %64 = vector.extract %63[0, 0, 0] : f32 from vector<1x1x1xf32>
    %65 = tpu.iota {dimensions = array<i32: 1>} : vector<8x128xi32>
    %cst_40 = arith.constant 0.000000e+00 : f32
    %66 = vector.broadcast %cst_40 : f32 to vector<8x128xf32>
    %c0_i32 = arith.constant 0 : i32
    %67 = vector.broadcast %c0_i32 : i32 to vector<8x128xi32>
    %68 = arith.cmpi eq, %65, %67 : vector<8x128xi32>
    %69 = arith.subf %52, %56 : f32
    %cst_41 = arith.constant 0.000000e+00 : f32
    %70 = vector.broadcast %69 : f32 to vector<8x128xf32>
    %71 = vector.broadcast %cst_41 : f32 to vector<8x128xf32>
    %72 = arith.select %68, %70, %71 : vector<8x128xi1>, vector<8x128xf32>
    %73 = arith.addf %66, %72 : vector<8x128xf32>
    %c1_i32 = arith.constant 1 : i32
    %74 = vector.broadcast %c1_i32 : i32 to vector<8x128xi32>
    %75 = arith.cmpi eq, %65, %74 : vector<8x128xi32>
    %76 = arith.subf %56, %60 : f32
    %cst_42 = arith.constant 0.000000e+00 : f32
    %77 = vector.broadcast %76 : f32 to vector<8x128xf32>
    %78 = vector.broadcast %cst_42 : f32 to vector<8x128xf32>
    %79 = arith.select %75, %77, %78 : vector<8x128xi1>, vector<8x128xf32>
    %80 = arith.addf %73, %79 : vector<8x128xf32>
    %c2_i32 = arith.constant 2 : i32
    %81 = vector.broadcast %c2_i32 : i32 to vector<8x128xi32>
    %82 = arith.cmpi eq, %65, %81 : vector<8x128xi32>
    %83 = arith.subf %60, %64 : f32
    %cst_43 = arith.constant 0.000000e+00 : f32
    %84 = vector.broadcast %83 : f32 to vector<8x128xf32>
    %85 = vector.broadcast %cst_43 : f32 to vector<8x128xf32>
    %86 = arith.select %82, %84, %85 : vector<8x128xi1>, vector<8x128xf32>
    %87 = arith.addf %80, %86 : vector<8x128xf32>
    %c0_44 = arith.constant 0 : index
    %c0_45 = arith.constant 0 : index
    %c0_46 = arith.constant 0 : index
    %c0_47 = arith.constant 0 : index
    %88 = vector.load %arg7[%c0_44, %c0_45, %c0_46, %c0_47] : memref<1x1x8x128xf32, #tpu.memory_space<vmem>>, vector<1x1x8x128xf32>
    %89 = vector.shape_cast %88 : vector<1x1x8x128xf32> to vector<8x128xf32>
    %90 = vector.shape_cast %87 : vector<8x128xf32> to vector<1x1x8x128xf32>
    tpu.vector_store %arg7[%c0_44, %c0_45, %c0_46, %c0_47], %90 {strides = array<i32>} : memref<1x1x8x128xf32, #tpu.memory_space<vmem>>, vector<1x1x8x128xf32>,
    return
  }
  func.func @transform_0(%arg0: i32, %arg1: i32) -> (i32, i32, i32, i32) {
    %c0_i32 = arith.constant 0 : i32
    %c0_i32_0 = arith.constant 0 : i32
    %c0_i32_1 = arith.constant 0 : i32
    %c0_i32_2 = arith.constant 0 : i32
    return %arg0, %c0_i32, %c0_i32_0, %c0_i32_1 : i32, i32, i32, i32
  }
  func.func @transform_1(%arg0: i32, %arg1: i32) -> (i32, i32, i32, i32) {
    %c0_i32 = arith.constant 0 : i32
    %c0_i32_0 = arith.constant 0 : i32
    %c0_i32_1 = arith.constant 0 : i32
    return %arg0, %c0_i32, %c0_i32_0, %arg1 : i32, i32, i32, i32
  }
  func.func @transform_2(%arg0: i32, %arg1: i32) -> (i32, i32) {
    %c0_i32 = arith.constant 0 : i32
    %c0_i32_0 = arith.constant 0 : i32
    %c0_i32_1 = arith.constant 0 : i32
    return %c0_i32, %c0_i32_0 : i32, i32
  }
  func.func @transform_3(%arg0: i32, %arg1: i32) -> (i32, i32) {
    %c0_i32 = arith.constant 0 : i32
    %c0_i32_0 = arith.constant 0 : i32
    return %c0_i32, %arg1 : i32, i32
  }
  func.func @transform_4(%arg0: i32, %arg1: i32) -> (i32, i32, i32, i32) {
    %c0_i32 = arith.constant 0 : i32
    %c0_i32_0 = arith.constant 0 : i32
    %c0_i32_1 = arith.constant 0 : i32
    return %arg0, %c0_i32, %c0_i32_0, %arg1 : i32, i32, i32, i32
  }
  func.func @transform_5(%arg0: i32, %arg1: i32) -> (i32, i32, i32, i32) {
    %c0_i32 = arith.constant 0 : i32
    %c0_i32_0 = arith.constant 0 : i32
    %c0_i32_1 = arith.constant 0 : i32
    return %arg0, %arg1, %c0_i32, %c0_i32_0 : i32, i32, i32, i32
  }
}

</mosaic_0001>

<llo_original>
// kernel: tpu_custom_call.1
$region0: #{tpu_custom_call.1}
  #allocation0 [shape = 'u32[]', space=smem, size = 0x4, offset = 0x4, fixed_abs, tag = 'smem constant byte address 0x4 - core index']
  #allocation1 [shape = 'u32[144,128]{1,0:T(1,128)}', space=vmem, size = 0x12000, scoped, tag = 'internal scratch']
  %s0 = inlined_call_operand.hbm [shape: f32[2,4,8,8], index: 0, kind: input, shape index: {}]
  %s1 = inlined_call_operand.hbm [shape: f32[2,4,16,16], index: 1, kind: input, shape index: {}]
  %s2 = inlined_call_operand.vmem [shape: f32[16,8], index: 2, kind: input, shape index: {}]
  %s3 = inlined_call_operand.vmem [shape: f32[8,16], index: 3, kind: input, shape index: {}]
  %s4 = inlined_call_operand.hbm [shape: f32[2,4,16,16], index: 4, kind: output, shape index: {0}]
  %s5 = inlined_call_operand.hbm [shape: f32[2,1,8,128], index: 5, kind: output, shape index: {1}]
  %6 = xla_tuple %s4, %s5
  %s7 = sld [smem:[#allocation0]]
  $region65: #{tpu_custom_call.1} parent=0
    _
  %s9 = ssub.s32 1, %s7
  %s10 = scalar_select 0, %s9, %s7
  $region1: #{tpu_custom_call.1} parent=0
    #allocation2 [shape = 'u8[32768]{0}', space=vmem, size = 0x8000, scoped, tag = 'input window, operand 0']
    #allocation3 [shape = 's32[2]{0}', space=sflag, size = 0x8, scoped, tag = 'scoped memory for tpu_custom_call.1']
    #allocation4 [shape = 's32[2]{0}', space=sflag, size = 0x8, scoped, tag = 'scoped memory for tpu_custom_call.1']
    #allocation5 [shape = 'u8[65536]{0}', space=vmem, size = 0x10000, scoped, tag = 'input window, operand 1']
    #allocation6 [shape = 's32[2]{0}', space=sflag, size = 0x8, scoped, tag = 'scoped memory for tpu_custom_call.1']
    #allocation7 [shape = 'u8[65536]{0}', space=vmem, size = 0x10000, scoped, tag = 'output window, operand 0']
    #allocation8 [shape = 'u8[8192]{0}', space=vmem, size = 0x2000, scoped, tag = 'output window, operand 1']
    #allocation9 [shape = 's32[2]{0}', space=sflag, size = 0x8, scoped, tag = 'scoped memory for tpu_custom_call.1']
    %11 = vsyncpa [#allocation3], 0
    %s12 = scalar_lea.sflag [#allocation3], 1
    %13 = vsyncpa %s12, 0
    %14 = vsyncpa [#allocation6], 0
    %s15 = scalar_lea.sflag [#allocation6], 1
    %16 = vsyncpa %s15, 0
    %17 = vsyncpa [#allocation4], 0
    %s18 = scalar_lea.sflag [#allocation4], 1
    %19 = vsyncpa %s18, 0
    %20 = vsyncpa [#allocation9], 0
    %s21 = scalar_lea.sflag [#allocation9], 1
    %22 = vsyncpa %s21, 0
    loop: start=0, step=1, limit=4
    $region2: #{tpu_custom_call.1} parent=1 // loop_pre_header
      _
    $region3: #{tpu_custom_call.1} parent=1 // loop_header
      %s24 = sphi 0, %s28
      %p25 = scmp.ge.s32.totalorder %s24, 4
      %s31 = sphi 0, %s43
      %s32 = sphi 0, %s39
      %s33 = sphi 0, %s31
      %s34 = sphi 0, %s32
      %s35 = sphi 0, %s33
      %s36 = sphi 0, %s34
      %s46 = sphi 0, %s48
      %s49 = sphi 0, %s46
      %s50 = sphi 0, %s49
      %s66 = sphi 0, %s50
      %s74 = sphi 0, %s76
      %s77 = sphi 0, %s74
      %s78 = sphi 0, %s77
      %s94 = sphi 0, %s78
      %s98 = sphi 0, %s98
      %s100 = sphi 0, %s98
      %s101 = sphi 0, %s100
      %s115 = sphi 0, %s101
      %s121 = sphi 0, %s123
      %s124 = sphi 0, %s121
      %s125 = sphi 0, %s124
      %s141 = sphi 0, %s125
      %s149 = sphi 0, %s151
      %s152 = sphi 0, %s149
      %s153 = sphi 0, %s152
      %s169 = sphi 0, %s153
      %s177 = sphi 0, %s179
      %s180 = sphi 0, %s177
      %s181 = sphi 0, %s180
      %s197 = sphi 0, %s181
    $region4: #{tpu_custom_call.1} parent=1 // loop_header_branch
      %27 = sbr.rel (%p25) target = $region8
    $region5: #{tpu_custom_call.1} parent=1 // loop_body
      %s29 = ssub.s32 %s24, 1
      %s30 = ssub.s32 %s24, 2
      %s37 = sadd.s32 1, %s32
      %p38 = scmp.ge.s32.totalorder %s37, 1
      %s39 = scalar_select %p38, 0, %s37
      %s40 = sadd.s32 1, %s31
      %s41 = scalar_select %p38, %s40, %s31
      %p42 = scmp.ge.s32.totalorder %s41, 2
      %s43 = scalar_select %p42, 0, %s41
      %s44 = ssub.s32 %s31, %s43
      %p45 = scmp.eq.s32.totalorder %s44, 0
      %s47 = sadd.s32 %s46, 1
      %s48 = scalar_select %p45, %s46, %s47
      %p51 = pneg %p45
      %p52 = scmp.eq.s32.totalorder %s24, 1
      %p53 = por %p51, %p52
      %p54 = scmp.ne.s32.totalorder %s46, %s49
      %p55 = scmp.eq.s32.totalorder %s24, 0
      %p56 = por %p54, %p55
      %p57 = scmp.ne.s32.totalorder %s46, %s49
      %p58 = scmp.eq.s32.totalorder %s29, 1
      %p59 = por %p57, %p58
      %p60 = scmp.ne.s32.totalorder %s49, %s50
      %p61 = scmp.eq.s32.totalorder %s29, 0
      %p62 = por %p60, %p61
      %p63 = scmp.ne.s32.totalorder %s49, %s50
      %p64 = scmp.eq.s32.totalorder %s30, 1
      %p65 = por %p63, %p64
      %p67 = scmp.ne.s32.totalorder %s50, %s66
      %p68 = scmp.eq.s32.totalorder %s30, 0
      %p69 = por %p67, %p68
      %s70 = ssub.s32 %s31, %s43
      %s71 = ssub.s32 %s32, %s39
      %s72 = sor.u32 %s70, %s71
      %p73 = scmp.eq.s32.totalorder %s72, 0
      %s75 = sadd.s32 %s74, 1
      %s76 = scalar_select %p73, %s74, %s75
      %p79 = pneg %p73
      %p80 = scmp.eq.s32.totalorder %s24, 1
      %p81 = por %p79, %p80
      %p82 = scmp.ne.s32.totalorder %s74, %s77
      %p83 = scmp.eq.s32.totalorder %s24, 0
      %p84 = por %p82, %p83
      %p85 = scmp.ne.s32.totalorder %s74, %s77
      %p86 = scmp.eq.s32.totalorder %s29, 1
      %p87 = por %p85, %p86
      %p88 = scmp.ne.s32.totalorder %s77, %s78
      %p89 = scmp.eq.s32.totalorder %s29, 0
      %p90 = por %p88, %p89
      %p91 = scmp.ne.s32.totalorder %s77, %s78
      %p92 = scmp.eq.s32.totalorder %s30, 1
      %p93 = por %p91, %p92
      %p95 = scmp.ne.s32.totalorder %s78, %s94
      %p96 = scmp.eq.s32.totalorder %s30, 0
      %p97 = por %p95, %p96
      %s99 = sadd.s32 %s98, 1
      %p102 = scmp.eq.s32.totalorder %s24, 1
      %p103 = scmp.ne.s32.totalorder %s98, %s100
      %p104 = scmp.eq.s32.totalorder %s24, 0
      %p105 = por %p103, %p104
      %p106 = scmp.ne.s32.totalorder %s98, %s100
      %p107 = scmp.eq.s32.totalorder %s29, 1
      %p108 = por %p106, %p107
      %p109 = scmp.ne.s32.totalorder %s100, %s101
      %p110 = scmp.eq.s32.totalorder %s29, 0
      %p111 = por %p109, %p110
      %p112 = scmp.ne.s32.totalorder %s100, %s101
      %p113 = scmp.eq.s32.totalorder %s30, 1
      %p114 = por %p112, %p113
      %p116 = scmp.ne.s32.totalorder %s101, %s115
      %p117 = scmp.eq.s32.totalorder %s30, 0
      %p118 = por %p116, %p117
      %s119 = ssub.s32 %s32, %s39
      %p120 = scmp.eq.s32.totalorder %s119, 0
      %s122 = sadd.s32 %s121, 1
      %s123 = scalar_select %p120, %s121, %s122
      %p126 = pneg %p120
      %p127 = scmp.eq.s32.totalorder %s24, 1
      %p128 = por %p126, %p127
      %p129 = scmp.ne.s32.totalorder %s121, %s124
      %p130 = scmp.eq.s32.totalorder %s24, 0
      %p131 = por %p129, %p130
      %p132 = scmp.ne.s32.totalorder %s121, %s124
      %p133 = scmp.eq.s32.totalorder %s29, 1
      %p134 = por %p132, %p133
      %p135 = scmp.ne.s32.totalorder %s124, %s125
      %p136 = scmp.eq.s32.totalorder %s29, 0
      %p137 = por %p135, %p136
      %p138 = scmp.ne.s32.totalorder %s124, %s125
      %p139 = scmp.eq.s32.totalorder %s30, 1
      %p140 = por %p138, %p139
      %p142 = scmp.ne.s32.totalorder %s125, %s141
      %p143 = scmp.eq.s32.totalorder %s30, 0
      %p144 = por %p142, %p143
      %s145 = ssub.s32 %s31, %s43
      %s146 = ssub.s32 %s32, %s39
      %s147 = sor.u32 %s145, %s146
      %p148 = scmp.eq.s32.totalorder %s147, 0
      %s150 = sadd.s32 %s149, 1
      %s151 = scalar_select %p148, %s149, %s150
      %p154 = pneg %p148
      %p155 = scmp.eq.s32.totalorder %s24, 1
      %p156 = por %p154, %p155
      %p157 = scmp.ne.s32.totalorder %s149, %s152
      %p158 = scmp.eq.s32.totalorder %s24, 0
      %p159 = por %p157, %p158
      %p160 = scmp.ne.s32.totalorder %s149, %s152
      %p161 = scmp.eq.s32.totalorder %s29, 1
      %p162 = por %p160, %p161
      %p163 = scmp.ne.s32.totalorder %s152, %s153
      %p164 = scmp.eq.s32.totalorder %s29, 0
      %p165 = por %p163, %p164
      %p166 = scmp.ne.s32.totalorder %s152, %s153
      %p167 = scmp.eq.s32.totalorder %s30, 1
      %p168 = por %p166, %p167
      %p170 = scmp.ne.s32.totalorder %s153, %s169
      %p171 = scmp.eq.s32.totalorder %s30, 0
      %p172 = por %p170, %p171
      %s173 = ssub.s32 %s31, %s43
      %s174 = ssub.s32 %s32, %s39
      %s175 = sor.u32 %s173, %s174
      %p176 = scmp.eq.s32.totalorder %s175, 0
      %s178 = sadd.s32 %s177, 1
      %s179 = scalar_select %p176, %s177, %s178
      %p182 = pneg %p176
      %p183 = scmp.eq.s32.totalorder %s24, 1
      %p184 = por %p182, %p183
      %p185 = scmp.ne.s32.totalorder %s177, %s180
      %p186 = scmp.eq.s32.totalorder %s24, 0
      %p187 = por %p185, %p186
      %p188 = scmp.ne.s32.totalorder %s177, %s180
      %p189 = scmp.eq.s32.totalorder %s29, 1
      %p190 = por %p188, %p189
      %p191 = scmp.ne.s32.totalorder %s180, %s181
      %p192 = scmp.eq.s32.totalorder %s29, 0
      %p193 = por %p191, %p192
      %p194 = scmp.ne.s32.totalorder %s180, %s181
      %p195 = scmp.eq.s32.totalorder %s30, 1
      %p196 = por %p194, %p195
      %p198 = scmp.ne.s32.totalorder %s181, %s197
      %p199 = scmp.eq.s32.totalorder %s30, 0
      %p200 = por %p198, %p199
      %p201 = scmp.le.s32.totalorder 1, %s24
      %p202 = scmp.lt.s32.totalorder %s24, 3
      %p203 = pnand %p201, %p202
      %p204 = pneg %p203
      // Predicated region
      $region9: #{tpu_custom_call.1} parent=5 // pred_check
        _
      $region10: #{tpu_custom_call.1} parent=5 // pred_check_branch
        %206 = sbr.rel (%p203) target = $region12
      $region11: #{tpu_custom_call.1} parent=5 // pred_region
        %s207 = ssub.s32 %s24, 1
        // Predicated region
        $region13: #{tpu_custom_call.1} parent=11 // pred_check
          %p208 = pneg %p111
        $region14: #{tpu_custom_call.1} parent=11 // pred_check_branch
          %210 = sbr.rel (%p208) target = $region16
        $region15: #{tpu_custom_call.1} parent=11 // pred_region
          _
        $region16: #{tpu_custom_call.1} parent=11 // pred_fallthru
          _
        // Predicated region
        $region17: #{tpu_custom_call.1} parent=11 // pred_check
          %p211 = pneg %p137
        $region18: #{tpu_custom_call.1} parent=11 // pred_check_branch
          %213 = sbr.rel (%p211) target = $region20
        $region19: #{tpu_custom_call.1} parent=11 // pred_region
          %p214 = scmp.lt.s32.totalorder %s34, 0
          %s215 = scalar_select %p214, %s34, 0
          %s216 = smul.addr %s215, 8
          %s217 = scalar_lea.vmem %s3, %s216
        $region20: #{tpu_custom_call.1} parent=11 // pred_fallthru
          _
      $region12: #{tpu_custom_call.1} parent=5 // pred_fallthru
        _
      %p218 = scmp.lt.s32.totalorder %s24, 2
      // Predicated region
      $region21: #{tpu_custom_call.1} parent=5 // pred_check
        %p219 = pneg %p218
      $region22: #{tpu_custom_call.1} parent=5 // pred_check_branch
        %221 = sbr.rel (%p219) target = $region24
      $region23: #{tpu_custom_call.1} parent=5 // pred_region
        // Predicated region
        $region25: #{tpu_custom_call.1} parent=23 // pred_check
          %p222 = pneg %p56
        $region26: #{tpu_custom_call.1} parent=23 // pred_check_branch
          %224 = sbr.rel (%p222) target = $region28
        $region27: #{tpu_custom_call.1} parent=23 // pred_region
          %s225 = sand.u32 %s46, 1
          %s226 = scalar_lea.sflag [#allocation3], %s225
          %s227 = sand.u32 %s46, 1
          %s228 = smul.addr %s227, 32
          %s229 = scalar_lea.vmem [#allocation2], %s228
          %s231 = ssub.s32 512, 512
          %232 = vsyncadd %s226, %s231
          %s233 = smul.addr %s31, 4
          %s234 = smul.addr %s233, 128
          %s235 = scalar_lea.hbm %s0, %s234
          %s236 = sshll.u32 %s229, 4
          %s237 = int_to_ptr.vmem [resolvable:$true] %s236
          %242 = dma.hbm_to_vmem [thread:$0]  %s235, 512, %s237, %s226, 128, 128, 8
        $region28: #{tpu_custom_call.1} parent=23 // pred_fallthru
          _
        // Predicated region
        $region29: #{tpu_custom_call.1} parent=23 // pred_check
          %p243 = pneg %p84
        $region30: #{tpu_custom_call.1} parent=23 // pred_check_branch
          %245 = sbr.rel (%p243) target = $region32
        $region31: #{tpu_custom_call.1} parent=23 // pred_region
          %s246 = sand.u32 %s74, 1
          %s247 = scalar_lea.sflag [#allocation6], %s246
          %s248 = sand.u32 %s74, 1
          %s249 = smul.addr %s248, 64
          %s250 = scalar_lea.vmem [#allocation5], %s249
          %s252 = ssub.s32 1024, 1024
          %253 = vsyncadd %s247, %s252
          %s254 = smul.addr %s31, 8
          %s255 = sadd.s32 %s32, %s254
          %s256 = smul.addr %s255, 128
          %s257 = scalar_lea.hbm %s1, %s256
          %s258 = sshll.u32 %s250, 4
          %s259 = int_to_ptr.vmem [resolvable:$true] %s258
          %264 = dma.hbm_to_vmem [thread:$0]  %s257, 1024, %s259, %s247, 128, 128, 8
        $region32: #{tpu_custom_call.1} parent=23 // pred_fallthru
          _
      $region24: #{tpu_custom_call.1} parent=5 // pred_fallthru
        _
      %p265 = scmp.le.s32.totalorder 1, %s24
      %p266 = scmp.lt.s32.totalorder %s24, 3
      %p267 = pnand %p265, %p266
      %p268 = pneg %p267
      // Predicated region
      $region33: #{tpu_custom_call.1} parent=5 // pred_check
        _
      $region34: #{tpu_custom_call.1} parent=5 // pred_check_branch
        %270 = sbr.rel (%p267) target = $region36
      $region35: #{tpu_custom_call.1} parent=5 // pred_region
        %s271 = ssub.s32 %s24, 1
        %s272 = sand.u32 %s49, 1
        %s273 = scalar_lea.sflag [#allocation3], %s272
        %s274 = sand.u32 %s49, 1
        %s275 = smul.addr %s274, 32
        %s276 = scalar_lea.vmem [#allocation2], %s275
        // Predicated region
        $region37: #{tpu_custom_call.1} parent=35 // pred_check
          %p277 = pneg %p62
        $region38: #{tpu_custom_call.1} parent=35 // pred_check_branch
          %279 = sbr.rel (%p277) target = $region40
        $region39: #{tpu_custom_call.1} parent=35 // pred_region
          %280 = dma.done %s273, 512
        $region40: #{tpu_custom_call.1} parent=35 // pred_fallthru
          _
        %s281 = sand.u32 %s77, 1
        %s282 = scalar_lea.sflag [#allocation6], %s281
        %s283 = sand.u32 %s77, 1
        %s284 = smul.addr %s283, 64
        %s285 = scalar_lea.vmem [#allocation5], %s284
        // Predicated region
        $region41: #{tpu_custom_call.1} parent=35 // pred_check
          %p286 = pneg %p90
        $region42: #{tpu_custom_call.1} parent=35 // pred_check_branch
          %288 = sbr.rel (%p286) target = $region44
        $region43: #{tpu_custom_call.1} parent=35 // pred_region
          %289 = dma.done %s282, 1024
        $region44: #{tpu_custom_call.1} parent=35 // pred_fallthru
          _
        %s290 = sand.u32 %s49, 1
        %s291 = scalar_lea.sflag [#allocation3], %s290
        %s292 = sand.u32 %s49, 1
        %s293 = smul.addr %s292, 32
        %s294 = scalar_lea.vmem [#allocation2], %s293
        %p295 = pneg %p62
        %p296 = pneg %p59
        %s297 = sand.u32 %s77, 1
        %s298 = scalar_lea.sflag [#allocation6], %s297
        %s299 = sand.u32 %s77, 1
        %s300 = smul.addr %s299, 64
        %s301 = scalar_lea.vmem [#allocation5], %s300
        %p302 = pneg %p90
        %p303 = pneg %p87
        %p304 = pneg %p111
        %p305 = pneg %p108
        %p306 = scmp.lt.s32.totalorder %s34, 0
        %s307 = scalar_select %p306, %s34, 0
        %s308 = smul.addr %s307, 8
        %s309 = scalar_lea.vmem %s3, %s308
        %p310 = pneg %p137
        %p311 = pneg %p134
        %p312 = pneg %p165
        %p313 = pneg %p162
        %s314 = sand.u32 %s152, 1
        %s315 = scalar_lea.sflag [#allocation4], %s314
        %s316 = sand.u32 %s152, 1
        %s317 = smul.addr %s316, 64
        %s318 = scalar_lea.vmem [#allocation7], %s317
        %p319 = pneg %p193
        %p320 = pneg %p190
        %s321 = sand.u32 %s180, 1
        %s322 = scalar_lea.sflag [#allocation9], %s321
        %s323 = sand.u32 %s180, 1
        %s324 = smul.addr %s323, 8
        %s325 = scalar_lea.vmem [#allocation8], %s324
        %p326 = scmp.lt.s32.totalorder %s34, 0
        %s327 = scalar_select %p326, %s34, 0
        %s328 = smul.addr %s327, 8
        %s329 = scalar_lea.vmem %s3, %s328
        %v330 = vld [vmem:[%s2] sm:$0xff]
        %v331 = vld [vmem:[%s2 + $0x8] sm:$0xff]
        %v332 = vld [vmem:[%s329] sm:$0xff]
        %v333 = vld [vmem:[%s276] sm:$0xff]
        %vm334 = vcmask 64512
        %v336 = vsel %vm334, %v330, 0
        %v339 = vsel %vm334, %v331, 0
        %341 = vmatprep.subr.mxu0 0.0
        %342 = vmatpush1.msra.mxu0 %v333
        %343 = vmatprep.subr.mxu0 0.0
        %344 = vmatpush1.msra.mxu0 0.0
        %345 = vmatprep.subr.mxu0 0.0
        %346 = vmatpush1.msra.mxu0 0.0
        %347 = vmatprep.subr.mxu0 0.0
        %348 = vmatpush1.msra.mxu0 0.0
        %349 = vmatprep.subr.mxu0 0.0
        %350 = vmatpush1.msra.mxu0 0.0
        %351 = vmatprep.subr.mxu0 0.0
        %352 = vmatpush1.msra.mxu0 0.0
        %353 = vmatprep.subr.mxu0 0.0
        %354 = vmatpush1.msra.mxu0 0.0
        %355 = vmatprep.subr.mxu0 0.0
        %356 = vmatpush1.msra.mxu0 0.0
        %357 = vmatprep.subr.mxu0 0.0
        %358 = vmatpush1.msra.mxu0 0.0
        %359 = vmatprep.subr.mxu0 0.0
        %360 = vmatpush1.msra.mxu0 0.0
        %361 = vmatprep.subr.mxu0 0.0
        %362 = vmatpush1.msra.mxu0 0.0
        %363 = vmatprep.subr.mxu0 0.0
        %364 = vmatpush1.msra.mxu0 0.0
        %365 = vmatprep.subr.mxu0 0.0
        %366 = vmatpush1.msra.mxu0 0.0
        %367 = vmatprep.subr.mxu0 0.0
        %368 = vmatpush1.msra.mxu0 0.0
        %369 = vmatprep.subr.mxu0 0.0
        %370 = vmatpush1.msra.mxu0 0.0
        %371 = vmatprep.subr.mxu0 0.0
        %372 = vmatpush1.msra.mxu0 0.0
        %373 = vmatprep.subr.mxu0 0.0
        %374 = vmatpush1.msra.mxu0 0.0
        %375 = vmatprep.subr.mxu0 0.0
        %376 = vmatpush1.msra.mxu0 0.0
        %377 = vmatprep.subr.mxu0 0.0
        %378 = vmatpush1.msra.mxu0 0.0
        %379 = vmatprep.subr.mxu0 0.0
        %380 = vmatpush1.msra.mxu0 0.0
        %381 = vmatprep.subr.mxu0 0.0
        %382 = vmatpush1.msra.mxu0 0.0
        %383 = vmatprep.subr.mxu0 0.0
        %384 = vmatpush1.msra.mxu0 0.0
        %385 = vmatprep.subr.mxu0 0.0
        %386 = vmatpush1.msra.mxu0 0.0
        %387 = vmatprep.subr.mxu0 0.0
        %388 = vmatpush1.msra.mxu0 0.0
        %389 = vmatprep.subr.mxu0 0.0
        %390 = vmatpush1.msra.mxu0 0.0
        %391 = vmatprep.subr.mxu0 0.0
        %392 = vmatpush1.msra.mxu0 0.0
        %393 = vmatprep.subr.mxu0 0.0
        %394 = vmatpush1.msra.mxu0 0.0
        %395 = vmatprep.subr.mxu0 0.0
        %396 = vmatpush1.msra.mxu0 0.0
        %397 = vmatprep.subr.mxu0 0.0
        %398 = vmatpush1.msra.mxu0 0.0
        %399 = vmatprep.subr.mxu0 0.0
        %400 = vmatpush1.msra.mxu0 0.0
        %401 = vmatprep.subr.mxu0 0.0
        %402 = vmatpush1.msra.mxu0 0.0
        %403 = vmatprep.subr.mxu0 0.0
        %404 = vmatpush1.msra.mxu0 0.0
        %405 = vmatprep.mubr.f32.mxu0 0.0
        %406 = vmatmul.mubr.f32.gmra.mrb[0].mxu0 %v336
        %v407 = vpop.f32.mrb[0].mxu0
        %v408 = vadd.f32 0.0, %v407
        %v409 = vpop.f32.mrb[0].mxu0
        %410 = vmatprep.mubr.f32.mxu0 0.0
        %411 = vmatmul.mubr.f32.gmra.mrb[0].mxu0 %v339
        %v412 = vpop.f32.mrb[0].mxu0
        %v413 = vadd.f32 0.0, %v412
        %v414 = vpop.f32.mrb[0].mxu0
        %415 = vdwg.mxu0
        %s416 = scalar_lea.vmem %s276, 8 [#allocation2]
        %v417 = vld [vmem:[%s416] sm:$0xff]
        %418 = vmatprep.subr.mxu0 0.0
        %419 = vmatpush1.msra.mxu0 %v417
        %420 = vmatprep.subr.mxu0 0.0
        %421 = vmatpush1.msra.mxu0 0.0
        %422 = vmatprep.subr.mxu0 0.0
        %423 = vmatpush1.msra.mxu0 0.0
        %424 = vmatprep.subr.mxu0 0.0
        %425 = vmatpush1.msra.mxu0 0.0
        %426 = vmatprep.subr.mxu0 0.0
        %427 = vmatpush1.msra.mxu0 0.0
        %428 = vmatprep.subr.mxu0 0.0
        %429 = vmatpush1.msra.mxu0 0.0
        %430 = vmatprep.subr.mxu0 0.0
        %431 = vmatpush1.msra.mxu0 0.0
        %432 = vmatprep.subr.mxu0 0.0
        %433 = vmatpush1.msra.mxu0 0.0
        %434 = vmatprep.subr.mxu0 0.0
        %435 = vmatpush1.msra.mxu0 0.0
        %436 = vmatprep.subr.mxu0 0.0
        %437 = vmatpush1.msra.mxu0 0.0
        %438 = vmatprep.subr.mxu0 0.0
        %439 = vmatpush1.msra.mxu0 0.0
        %440 = vmatprep.subr.mxu0 0.0
        %441 = vmatpush1.msra.mxu0 0.0
        %442 = vmatprep.subr.mxu0 0.0
        %443 = vmatpush1.msra.mxu0 0.0
        %444 = vmatprep.subr.mxu0 0.0
        %445 = vmatpush1.msra.mxu0 0.0
        %446 = vmatprep.subr.mxu0 0.0
        %447 = vmatpush1.msra.mxu0 0.0
        %448 = vmatprep.subr.mxu0 0.0
        %449 = vmatpush1.msra.mxu0 0.0
        %450 = vmatprep.subr.mxu0 0.0
        %451 = vmatpush1.msra.mxu0 0.0
        %452 = vmatprep.subr.mxu0 0.0
        %453 = vmatpush1.msra.mxu0 0.0
        %454 = vmatprep.subr.mxu0 0.0
        %455 = vmatpush1.msra.mxu0 0.0
        %456 = vmatprep.subr.mxu0 0.0
        %457 = vmatpush1.msra.mxu0 0.0
        %458 = vmatprep.subr.mxu0 0.0
        %459 = vmatpush1.msra.mxu0 0.0
        %460 = vmatprep.subr.mxu0 0.0
        %461 = vmatpush1.msra.mxu0 0.0
        %462 = vmatprep.subr.mxu0 0.0
        %463 = vmatpush1.msra.mxu0 0.0
        %464 = vmatprep.subr.mxu0 0.0
        %465 = vmatpush1.msra.mxu0 0.0
        %466 = vmatprep.subr.mxu0 0.0
        %467 = vmatpush1.msra.mxu0 0.0
        %468 = vmatprep.subr.mxu0 0.0
        %469 = vmatpush1.msra.mxu0 0.0
        %470 = vmatprep.subr.mxu0 0.0
        %471 = vmatpush1.msra.mxu0 0.0
        %472 = vmatprep.subr.mxu0 0.0
        %473 = vmatpush1.msra.mxu0 0.0
        %474 = vmatprep.subr.mxu0 0.0
        %475 = vmatpush1.msra.mxu0 0.0
        %476 = vmatprep.subr.mxu0 0.0
        %477 = vmatpush1.msra.mxu0 0.0
        %478 = vmatprep.subr.mxu0 0.0
        %479 = vmatpush1.msra.mxu0 0.0
        %480 = vmatprep.subr.mxu0 0.0
        %481 = vmatpush1.msra.mxu0 0.0
        %482 = vmatprep.mubr.f32.mxu0 0.0
        %483 = vmatmul.mubr.f32.gmra.mrb[0].mxu0 %v336
        %v484 = vpop.f32.mrb[0].mxu0
        %v485 = vadd.f32 0.0, %v484
        %v486 = vpop.f32.mrb[0].mxu0
        %487 = vmatprep.mubr.f32.mxu0 0.0
        %488 = vmatmul.mubr.f32.gmra.mrb[0].mxu0 %v339
        %v489 = vpop.f32.mrb[0].mxu0
        %v490 = vadd.f32 0.0, %v489
        %v491 = vpop.f32.mrb[0].mxu0
        %492 = vdwg.mxu0
        %s493 = scalar_lea.vmem %s276, 16 [#allocation2]
        %v494 = vld [vmem:[%s493] sm:$0xff]
        %495 = vmatprep.subr.mxu0 0.0
        %496 = vmatpush1.msra.mxu0 %v494
        %497 = vmatprep.subr.mxu0 0.0
        %498 = vmatpush1.msra.mxu0 0.0
        %499 = vmatprep.subr.mxu0 0.0
        %500 = vmatpush1.msra.mxu0 0.0
        %501 = vmatprep.subr.mxu0 0.0
        %502 = vmatpush1.msra.mxu0 0.0
        %503 = vmatprep.subr.mxu0 0.0
        %504 = vmatpush1.msra.mxu0 0.0
        %505 = vmatprep.subr.mxu0 0.0
        %506 = vmatpush1.msra.mxu0 0.0
        %507 = vmatprep.subr.mxu0 0.0
        %508 = vmatpush1.msra.mxu0 0.0
        %509 = vmatprep.subr.mxu0 0.0
        %510 = vmatpush1.msra.mxu0 0.0
        %511 = vmatprep.subr.mxu0 0.0
        %512 = vmatpush1.msra.mxu0 0.0
        %513 = vmatprep.subr.mxu0 0.0
        %514 = vmatpush1.msra.mxu0 0.0
        %515 = vmatprep.subr.mxu0 0.0
        %516 = vmatpush1.msra.mxu0 0.0
        %517 = vmatprep.subr.mxu0 0.0
        %518 = vmatpush1.msra.mxu0 0.0
        %519 = vmatprep.subr.mxu0 0.0
        %520 = vmatpush1.msra.mxu0 0.0
        %521 = vmatprep.subr.mxu0 0.0
        %522 = vmatpush1.msra.mxu0 0.0
        %523 = vmatprep.subr.mxu0 0.0
        %524 = vmatpush1.msra.mxu0 0.0
        %525 = vmatprep.subr.mxu0 0.0
        %526 = vmatpush1.msra.mxu0 0.0
        %527 = vmatprep.subr.mxu0 0.0
        %528 = vmatpush1.msra.mxu0 0.0
        %529 = vmatprep.subr.mxu0 0.0
        %530 = vmatpush1.msra.mxu0 0.0
        %531 = vmatprep.subr.mxu0 0.0
        %532 = vmatpush1.msra.mxu0 0.0
        %533 = vmatprep.subr.mxu0 0.0
        %534 = vmatpush1.msra.mxu0 0.0
        %535 = vmatprep.subr.mxu0 0.0
        %536 = vmatpush1.msra.mxu0 0.0
        %537 = vmatprep.subr.mxu0 0.0
        %538 = vmatpush1.msra.mxu0 0.0
        %539 = vmatprep.subr.mxu0 0.0
        %540 = vmatpush1.msra.mxu0 0.0
        %541 = vmatprep.subr.mxu0 0.0
        %542 = vmatpush1.msra.mxu0 0.0
        %543 = vmatprep.subr.mxu0 0.0
        %544 = vmatpush1.msra.mxu0 0.0
        %545 = vmatprep.subr.mxu0 0.0
        %546 = vmatpush1.msra.mxu0 0.0
        %547 = vmatprep.subr.mxu0 0.0
        %548 = vmatpush1.msra.mxu0 0.0
        %549 = vmatprep.subr.mxu0 0.0
        %550 = vmatpush1.msra.mxu0 0.0
        %551 = vmatprep.subr.mxu0 0.0
        %552 = vmatpush1.msra.mxu0 0.0
        %553 = vmatprep.subr.mxu0 0.0
        %554 = vmatpush1.msra.mxu0 0.0
        %555 = vmatprep.subr.mxu0 0.0
        %556 = vmatpush1.msra.mxu0 0.0
        %557 = vmatprep.subr.mxu0 0.0
        %558 = vmatpush1.msra.mxu0 0.0
        %559 = vmatprep.mubr.f32.mxu0 0.0
        %560 = vmatmul.mubr.f32.gmra.mrb[0].mxu0 %v336
        %v561 = vpop.f32.mrb[0].mxu0
        %v562 = vadd.f32 0.0, %v561
        %v563 = vpop.f32.mrb[0].mxu0
        %564 = vmatprep.mubr.f32.mxu0 0.0
        %565 = vmatmul.mubr.f32.gmra.mrb[0].mxu0 %v339
        %v566 = vpop.f32.mrb[0].mxu0
        %v567 = vadd.f32 0.0, %v566
        %v568 = vpop.f32.mrb[0].mxu0
        %569 = vdwg.mxu0
        %s570 = scalar_lea.vmem %s276, 24 [#allocation2]
        %v571 = vld [vmem:[%s570] sm:$0xff]
        %572 = vmatprep.subr.mxu0 0.0
        %573 = vmatpush1.msra.mxu0 %v571
        %574 = vmatprep.subr.mxu0 0.0
        %575 = vmatpush1.msra.mxu0 0.0
        %576 = vmatprep.subr.mxu0 0.0
        %577 = vmatpush1.msra.mxu0 0.0
        %578 = vmatprep.subr.mxu0 0.0
        %579 = vmatpush1.msra.mxu0 0.0
        %580 = vmatprep.subr.mxu0 0.0
        %581 = vmatpush1.msra.mxu0 0.0
        %582 = vmatprep.subr.mxu0 0.0
        %583 = vmatpush1.msra.mxu0 0.0
        %584 = vmatprep.subr.mxu0 0.0
        %585 = vmatpush1.msra.mxu0 0.0
        %586 = vmatprep.subr.mxu0 0.0
        %587 = vmatpush1.msra.mxu0 0.0
        %588 = vmatprep.subr.mxu0 0.0
        %589 = vmatpush1.msra.mxu0 0.0
        %590 = vmatprep.subr.mxu0 0.0
        %591 = vmatpush1.msra.mxu0 0.0
        %592 = vmatprep.subr.mxu0 0.0
        %593 = vmatpush1.msra.mxu0 0.0
        %594 = vmatprep.subr.mxu0 0.0
        %595 = vmatpush1.msra.mxu0 0.0
        %596 = vmatprep.subr.mxu0 0.0
        %597 = vmatpush1.msra.mxu0 0.0
        %598 = vmatprep.subr.mxu0 0.0
        %599 = vmatpush1.msra.mxu0 0.0
        %600 = vmatprep.subr.mxu0 0.0
        %601 = vmatpush1.msra.mxu0 0.0
        %602 = vmatprep.subr.mxu0 0.0
        %603 = vmatpush1.msra.mxu0 0.0
        %604 = vmatprep.subr.mxu0 0.0
        %605 = vmatpush1.msra.mxu0 0.0
        %606 = vmatprep.subr.mxu0 0.0
        %607 = vmatpush1.msra.mxu0 0.0
        %608 = vmatprep.subr.mxu0 0.0
        %609 = vmatpush1.msra.mxu0 0.0
        %610 = vmatprep.subr.mxu0 0.0
        %611 = vmatpush1.msra.mxu0 0.0
        %612 = vmatprep.subr.mxu0 0.0
        %613 = vmatpush1.msra.mxu0 0.0
        %614 = vmatprep.subr.mxu0 0.0
        %615 = vmatpush1.msra.mxu0 0.0
        %616 = vmatprep.subr.mxu0 0.0
        %617 = vmatpush1.msra.mxu0 0.0
        %618 = vmatprep.subr.mxu0 0.0
        %619 = vmatpush1.msra.mxu0 0.0
        %620 = vmatprep.subr.mxu0 0.0
        %621 = vmatpush1.msra.mxu0 0.0
        %622 = vmatprep.subr.mxu0 0.0
        %623 = vmatpush1.msra.mxu0 0.0
        %624 = vmatprep.subr.mxu0 0.0
        %625 = vmatpush1.msra.mxu0 0.0
        %626 = vmatprep.subr.mxu0 0.0
        %627 = vmatpush1.msra.mxu0 0.0
        %628 = vmatprep.subr.mxu0 0.0
        %629 = vmatpush1.msra.mxu0 0.0
        %630 = vmatprep.subr.mxu0 0.0
        %631 = vmatpush1.msra.mxu0 0.0
        %632 = vmatprep.subr.mxu0 0.0
        %633 = vmatpush1.msra.mxu0 0.0
        %634 = vmatprep.subr.mxu0 0.0
        %635 = vmatpush1.msra.mxu0 0.0
        %636 = vmatprep.mubr.f32.mxu0 0.0
        %637 = vmatmul.mubr.f32.gmra.mrb[0].mxu0 %v336
        %v638 = vpop.f32.mrb[0].mxu0
        %v639 = vadd.f32 0.0, %v638
        %v640 = vpop.f32.mrb[0].mxu0
        %641 = vmatprep.mubr.f32.mxu0 0.0
        %642 = vmatmul.mubr.f32.gmra.mrb[0].mxu0 %v339
        %v643 = vpop.f32.mrb[0].mxu0
        %v644 = vadd.f32 0.0, %v643
        %v645 = vpop.f32.mrb[0].mxu0
        %646 = vdwg.mxu0
        %v648 = vsel %vm334, %v408, 0
        %v651 = vsel %vm334, %v413, 0
        %v654 = vsel %vm334, %v485, 0
        %v657 = vsel %vm334, %v490, 0
        %v660 = vsel %vm334, %v562, 0
        %v663 = vsel %vm334, %v567, 0
        %v666 = vsel %vm334, %v639, 0
        %v669 = vsel %vm334, %v644, 0
        %671 = vmatprep.subr.mxu0 0.0
        %672 = vmatpush1.msra.mxu0 %v332
        %673 = vmatprep.subr.mxu0 0.0
        %674 = vmatpush1.msra.mxu0 0.0
        %675 = vmatprep.subr.mxu0 0.0
        %676 = vmatpush1.msra.mxu0 0.0
        %677 = vmatprep.subr.mxu0 0.0
        %678 = vmatpush1.msra.mxu0 0.0
        %679 = vmatprep.subr.mxu0 0.0
        %680 = vmatpush1.msra.mxu0 0.0
        %681 = vmatprep.subr.mxu0 0.0
        %682 = vmatpush1.msra.mxu0 0.0
        %683 = vmatprep.subr.mxu0 0.0
        %684 = vmatpush1.msra.mxu0 0.0
        %685 = vmatprep.subr.mxu0 0.0
        %686 = vmatpush1.msra.mxu0 0.0
        %687 = vmatprep.subr.mxu0 0.0
        %688 = vmatpush1.msra.mxu0 0.0
        %689 = vmatprep.subr.mxu0 0.0
        %690 = vmatpush1.msra.mxu0 0.0
        %691 = vmatprep.subr.mxu0 0.0
        %692 = vmatpush1.msra.mxu0 0.0
        %693 = vmatprep.subr.mxu0 0.0
        %694 = vmatpush1.msra.mxu0 0.0
        %695 = vmatprep.subr.mxu0 0.0
        %696 = vmatpush1.msra.mxu0 0.0
        %697 = vmatprep.subr.mxu0 0.0
        %698 = vmatpush1.msra.mxu0 0.0
        %699 = vmatprep.subr.mxu0 0.0
        %700 = vmatpush1.msra.mxu0 0.0
        %701 = vmatprep.subr.mxu0 0.0
        %702 = vmatpush1.msra.mxu0 0.0
        %703 = vmatprep.subr.mxu0 0.0
        %704 = vmatpush1.msra.mxu0 0.0
        %705 = vmatprep.subr.mxu0 0.0
        %706 = vmatpush1.msra.mxu0 0.0
        %707 = vmatprep.subr.mxu0 0.0
        %708 = vmatpush1.msra.mxu0 0.0
        %709 = vmatprep.subr.mxu0 0.0
        %710 = vmatpush1.msra.mxu0 0.0
        %711 = vmatprep.subr.mxu0 0.0
        %712 = vmatpush1.msra.mxu0 0.0
        %713 = vmatprep.subr.mxu0 0.0
        %714 = vmatpush1.msra.mxu0 0.0
        %715 = vmatprep.subr.mxu0 0.0
        %716 = vmatpush1.msra.mxu0 0.0
        %717 = vmatprep.subr.mxu0 0.0
        %718 = vmatpush1.msra.mxu0 0.0
        %719 = vmatprep.subr.mxu0 0.0
        %720 = vmatpush1.msra.mxu0 0.0
        %721 = vmatprep.subr.mxu0 0.0
        %722 = vmatpush1.msra.mxu0 0.0
        %723 = vmatprep.subr.mxu0 0.0
        %724 = vmatpush1.msra.mxu0 0.0
        %725 = vmatprep.subr.mxu0 0.0
        %726 = vmatpush1.msra.mxu0 0.0
        %727 = vmatprep.subr.mxu0 0.0
        %728 = vmatpush1.msra.mxu0 0.0
        %729 = vmatprep.subr.mxu0 0.0
        %730 = vmatpush1.msra.mxu0 0.0
        %731 = vmatprep.subr.mxu0 0.0
        %732 = vmatpush1.msra.mxu0 0.0
        %733 = vmatprep.subr.mxu0 0.0
        %734 = vmatpush1.msra.mxu0 0.0
        %735 = vmatprep.mubr.f32.mxu0 0.0
        %736 = vmatmul.mubr.f32.gmra.mrb[0].mxu0 %v648
        %v737 = vpop.f32.mrb[0].mxu0
        %v738 = vadd.f32 0.0, %v737
        %v739 = vpop.f32.mrb[0].mxu0
        %740 = vmatprep.mubr.f32.mxu0 0.0
        %741 = vmatmul.mubr.f32.gmra.mrb[0].mxu0 %v651
        %v742 = vpop.f32.mrb[0].mxu0
        %v743 = vadd.f32 0.0, %v742
        %v744 = vpop.f32.mrb[0].mxu0
        %745 = vmatprep.mubr.f32.mxu0 0.0
        %746 = vmatmul.mubr.f32.gmra.mrb[0].mxu0 %v654
        %v747 = vpop.f32.mrb[0].mxu0
        %v748 = vadd.f32 0.0, %v747
        %v749 = vpop.f32.mrb[0].mxu0
        %750 = vmatprep.mubr.f32.mxu0 0.0
        %751 = vmatmul.mubr.f32.gmra.mrb[0].mxu0 %v657
        %v752 = vpop.f32.mrb[0].mxu0
        %v753 = vadd.f32 0.0, %v752
        %v754 = vpop.f32.mrb[0].mxu0
        %755 = vmatprep.mubr.f32.mxu0 0.0
        %756 = vmatmul.mubr.f32.gmra.mrb[0].mxu0 %v660
        %v757 = vpop.f32.mrb[0].mxu0
        %v758 = vadd.f32 0.0, %v757
        %v759 = vpop.f32.mrb[0].mxu0
        %760 = vmatprep.mubr.f32.mxu0 0.0
        %761 = vmatmul.mubr.f32.gmra.mrb[0].mxu0 %v663
        %v762 = vpop.f32.mrb[0].mxu0
        %v763 = vadd.f32 0.0, %v762
        %v764 = vpop.f32.mrb[0].mxu0
        %765 = vmatprep.mubr.f32.mxu0 0.0
        %766 = vmatmul.mubr.f32.gmra.mrb[0].mxu0 %v666
        %v767 = vpop.f32.mrb[0].mxu0
        %v768 = vadd.f32 0.0, %v767
        %v769 = vpop.f32.mrb[0].mxu0
        %770 = vmatprep.mubr.f32.mxu0 0.0
        %771 = vmatmul.mubr.f32.gmra.mrb[0].mxu0 %v669
        %v772 = vpop.f32.mrb[0].mxu0
        %v773 = vadd.f32 0.0, %v772
        %v774 = vpop.f32.mrb[0].mxu0
        %775 = vdwg.mxu0
        %v776 = vld [vmem:[%s285] sm:$0xff]
        %v777 = vld [vmem:[%s285 + $0x8] sm:$0xff]
        %v778 = vld [vmem:[%s285 + $0x10] sm:$0xff]
        %v779 = vld [vmem:[%s285 + $0x18] sm:$0xff]
        %v780 = vld [vmem:[%s285 + $0x20] sm:$0xff]
        %v781 = vld [vmem:[%s285 + $0x28] sm:$0xff]
        %v782 = vld [vmem:[%s285 + $0x30] sm:$0xff]
        %v783 = vld [vmem:[%s285 + $0x38] sm:$0xff]
        %v784 = vsub.f32 %v738, %v776
        %v785 = vsub.f32 %v743, %v777
        %v786 = vsub.f32 %v748, %v778
        %v787 = vsub.f32 %v753, %v779
        %v788 = vsub.f32 %v758, %v780
        %v789 = vsub.f32 %v763, %v781
        %v790 = vsub.f32 %v768, %v782
        %v791 = vsub.f32 %v773, %v783
        %v792 = vmul.f32 %v784, %v784
        %v793 = vmul.f32 %v785, %v785
        %v794 = vmul.f32 %v786, %v786
        %v795 = vmul.f32 %v787, %v787
        %v796 = vmul.f32 %v788, %v788
        %v797 = vmul.f32 %v789, %v789
        %v798 = vmul.f32 %v790, %v790
        %v799 = vmul.f32 %v791, %v791
        %vm800 = vcmask 130048
        %801 = vst.msk [vmem:[%s318] sm:$0xff] %vm800, %v792
        %802 = vst.msk [vmem:[%s318 + $0x8] sm:$0xff] %vm800, %v793
        %803 = vst.msk [vmem:[%s318 + $0x10] sm:$0xff] %vm800, %v794
        %804 = vst.msk [vmem:[%s318 + $0x18] sm:$0xff] %vm800, %v795
        %805 = vst.msk [vmem:[%s318 + $0x20] sm:$0xff] %vm800, %v796
        %806 = vst.msk [vmem:[%s318 + $0x28] sm:$0xff] %vm800, %v797
        %807 = vst.msk [vmem:[%s318 + $0x30] sm:$0xff] %vm800, %v798
        %808 = vst.msk [vmem:[%s318 + $0x38] sm:$0xff] %vm800, %v799
        %vm809 = vcmp.ge.f32.partialorder %v776, 0.1
        %vm810 = vcmp.ge.f32.partialorder %v777, 0.1
        %vm811 = vcmp.ge.f32.partialorder %v778, 0.1
        %vm812 = vcmp.ge.f32.partialorder %v779, 0.1
        %vm813 = vcmp.ge.f32.partialorder %v780, 0.1
        %vm814 = vcmp.ge.f32.partialorder %v781, 0.1
        %vm815 = vcmp.ge.f32.partialorder %v782, 0.1
        %vm816 = vcmp.ge.f32.partialorder %v783, 0.1
        %v817 = vsel %vm809, 1, 0
        %v818 = vsel %vm810, 1, 0
        %v819 = vsel %vm811, 1, 0
        %v820 = vsel %vm812, 1, 0
        %v821 = vsel %vm813, 1, 0
        %v822 = vsel %vm814, 1, 0
        %v823 = vsel %vm815, 1, 0
        %v824 = vsel %vm816, 1, 0
        %v825 = vcvt.s32.f32 %v817
        %v826 = vcvt.s32.f32 %v818
        %v827 = vcvt.s32.f32 %v819
        %v828 = vcvt.s32.f32 %v820
        %v829 = vcvt.s32.f32 %v821
        %v830 = vcvt.s32.f32 %v822
        %v831 = vcvt.s32.f32 %v823
        %v832 = vcvt.s32.f32 %v824
        %v833 = vsel %vm800, %v825, 0.0
        %v834 = vsel %vm800, %v826, 0.0
        %v835 = vadd.f32 %v833, %v834
        %v836 = vsel %vm800, %v827, 0.0
        %v837 = vadd.f32 %v835, %v836
        %v838 = vsel %vm800, %v828, 0.0
        %v839 = vadd.f32 %v837, %v838
        %v840 = vsel %vm800, %v829, 0.0
        %v841 = vadd.f32 %v839, %v840
        %v842 = vsel %vm800, %v830, 0.0
        %v843 = vadd.f32 %v841, %v842
        %v844 = vsel %vm800, %v831, 0.0
        %v845 = vadd.f32 %v843, %v844
        %v846 = vsel %vm800, %v832, 0.0
        %v847 = vadd.f32 %v845, %v846
        %v848 = vrot.slane %v847, 4
        %v849 = vadd.f32 %v847, %v848
        %v850 = vrot.slane %v849, 2
        %v851 = vadd.f32 %v849, %v850
        %v852 = vrot.slane %v851, 1
        %v853 = vadd.f32 %v851, %v852
        %vm854 = vcmp.ge.f32.partialorder %v776, 0.3
        %vm855 = vcmp.ge.f32.partialorder %v777, 0.3
        %vm856 = vcmp.ge.f32.partialorder %v778, 0.3
        %vm857 = vcmp.ge.f32.partialorder %v779, 0.3
        %vm858 = vcmp.ge.f32.partialorder %v780, 0.3
        %vm859 = vcmp.ge.f32.partialorder %v781, 0.3
        %vm860 = vcmp.ge.f32.partialorder %v782, 0.3
        %vm861 = vcmp.ge.f32.partialorder %v783, 0.3
        %v862 = vsel %vm854, 1, 0
        %v863 = vsel %vm855, 1, 0
        %v864 = vsel %vm856, 1, 0
        %v865 = vsel %vm857, 1, 0
        %v866 = vsel %vm858, 1, 0
        %v867 = vsel %vm859, 1, 0
        %v868 = vsel %vm860, 1, 0
        %v869 = vsel %vm861, 1, 0
        %v870 = vcvt.s32.f32 %v862
        %v871 = vcvt.s32.f32 %v863
        %v872 = vcvt.s32.f32 %v864
        %v873 = vcvt.s32.f32 %v865
        %v874 = vcvt.s32.f32 %v866
        %v875 = vcvt.s32.f32 %v867
        %v876 = vcvt.s32.f32 %v868
        %v877 = vcvt.s32.f32 %v869
        %v878 = vsel %vm800, %v870, 0.0
        %v879 = vsel %vm800, %v871, 0.0
        %v880 = vadd.f32 %v878, %v879
        %v881 = vsel %vm800, %v872, 0.0
        %v882 = vadd.f32 %v880, %v881
        %v883 = vsel %vm800, %v873, 0.0
        %v884 = vadd.f32 %v882, %v883
        %v885 = vsel %vm800, %v874, 0.0
        %v886 = vadd.f32 %v884, %v885
        %v887 = vsel %vm800, %v875, 0.0
        %v888 = vadd.f32 %v886, %v887
        %v889 = vsel %vm800, %v876, 0.0
        %v890 = vadd.f32 %v888, %v889
        %v891 = vsel %vm800, %v877, 0.0
        %v892 = vadd.f32 %v890, %v891
        %v893 = vrot.slane %v892, 4
        %v894 = vadd.f32 %v892, %v893
        %v895 = vrot.slane %v894, 2
        %v896 = vadd.f32 %v894, %v895
        %v897 = vrot.slane %v896, 1
        %v898 = vadd.f32 %v896, %v897
        %vm899 = vcmp.ge.f32.partialorder %v776, 0.6
        %vm900 = vcmp.ge.f32.partialorder %v777, 0.6
        %vm901 = vcmp.ge.f32.partialorder %v778, 0.6
        %vm902 = vcmp.ge.f32.partialorder %v779, 0.6
        %vm903 = vcmp.ge.f32.partialorder %v780, 0.6
        %vm904 = vcmp.ge.f32.partialorder %v781, 0.6
        %vm905 = vcmp.ge.f32.partialorder %v782, 0.6
        %vm906 = vcmp.ge.f32.partialorder %v783, 0.6
        %v907 = vsel %vm899, 1, 0
        %v908 = vsel %vm900, 1, 0
        %v909 = vsel %vm901, 1, 0
        %v910 = vsel %vm902, 1, 0
        %v911 = vsel %vm903, 1, 0
        %v912 = vsel %vm904, 1, 0
        %v913 = vsel %vm905, 1, 0
        %v914 = vsel %vm906, 1, 0
        %v915 = vcvt.s32.f32 %v907
        %v916 = vcvt.s32.f32 %v908
        %v917 = vcvt.s32.f32 %v909
        %v918 = vcvt.s32.f32 %v910
        %v919 = vcvt.s32.f32 %v911
        %v920 = vcvt.s32.f32 %v912
        %v921 = vcvt.s32.f32 %v913
        %v922 = vcvt.s32.f32 %v914
        %v923 = vsel %vm800, %v915, 0.0
        %v924 = vsel %vm800, %v916, 0.0
        %v925 = vadd.f32 %v923, %v924
        %v926 = vsel %vm800, %v917, 0.0
        %v927 = vadd.f32 %v925, %v926
        %v928 = vsel %vm800, %v918, 0.0
        %v929 = vadd.f32 %v927, %v928
        %v930 = vsel %vm800, %v919, 0.0
        %v931 = vadd.f32 %v929, %v930
        %v932 = vsel %vm800, %v920, 0.0
        %v933 = vadd.f32 %v931, %v932
        %v934 = vsel %vm800, %v921, 0.0
        %v935 = vadd.f32 %v933, %v934
        %v936 = vsel %vm800, %v922, 0.0
        %v937 = vadd.f32 %v935, %v936
        %v938 = vrot.slane %v937, 4
        %v939 = vadd.f32 %v937, %v938
        %v940 = vrot.slane %v939, 2
        %v941 = vadd.f32 %v939, %v940
        %v942 = vrot.slane %v941, 1
        %v943 = vadd.f32 %v941, %v942
        %vm944 = vcmp.ge.f32.partialorder %v776, 1.0
        %vm945 = vcmp.ge.f32.partialorder %v777, 1.0
        %vm946 = vcmp.ge.f32.partialorder %v778, 1.0
        %vm947 = vcmp.ge.f32.partialorder %v779, 1.0
        %vm948 = vcmp.ge.f32.partialorder %v780, 1.0
        %vm949 = vcmp.ge.f32.partialorder %v781, 1.0
        %vm950 = vcmp.ge.f32.partialorder %v782, 1.0
        %vm951 = vcmp.ge.f32.partialorder %v783, 1.0
        %v952 = vsel %vm944, 1, 0
        %v953 = vsel %vm945, 1, 0
        %v954 = vsel %vm946, 1, 0
        %v955 = vsel %vm947, 1, 0
        %v956 = vsel %vm948, 1, 0
        %v957 = vsel %vm949, 1, 0
        %v958 = vsel %vm950, 1, 0
        %v959 = vsel %vm951, 1, 0
        %v960 = vcvt.s32.f32 %v952
        %v961 = vcvt.s32.f32 %v953
        %v962 = vcvt.s32.f32 %v954
        %v963 = vcvt.s32.f32 %v955
        %v964 = vcvt.s32.f32 %v956
        %v965 = vcvt.s32.f32 %v957
        %v966 = vcvt.s32.f32 %v958
        %v967 = vcvt.s32.f32 %v959
        %v968 = vsel %vm800, %v960, 0.0
        %v969 = vsel %vm800, %v961, 0.0
        %v970 = vadd.f32 %v968, %v969
        %v971 = vsel %vm800, %v962, 0.0
        %v972 = vadd.f32 %v970, %v971
        %v973 = vsel %vm800, %v963, 0.0
        %v974 = vadd.f32 %v972, %v973
        %v975 = vsel %vm800, %v964, 0.0
        %v976 = vadd.f32 %v974, %v975
        %v977 = vsel %vm800, %v965, 0.0
        %v978 = vadd.f32 %v976, %v977
        %v979 = vsel %vm800, %v966, 0.0
        %v980 = vadd.f32 %v978, %v979
        %v981 = vsel %vm800, %v967, 0.0
        %v982 = vadd.f32 %v980, %v981
        %v983 = vrot.slane %v982, 4
        %v984 = vadd.f32 %v982, %v983
        %v985 = vrot.slane %v984, 2
        %v986 = vadd.f32 %v984, %v985
        %v987 = vrot.slane %v986, 1
        %v988 = vadd.f32 %v986, %v987
        %vm989 = vcmask 122880
        %v990 = vsel %vm989, %v853, 0.0
        %991 = vadd.xlane.f32.xlu0 %v990
        %v992 = vpop.xlane.xlu0 %991
        %v993 = vrot.slane %v992, 4
        %v994 = vadd.f32 %v992, %v993
        %v995 = vrot.slane %v994, 2
        %v996 = vadd.f32 %v994, %v995
        %v997 = vrot.slane %v996, 1
        %v998 = vadd.f32 %v996, %v997
        %s999 = vtos %v998
        %v1000 = vsel %vm989, %v898, 0.0
        %1001 = vadd.xlane.f32.xlu0 %v1000
        %v1002 = vpop.xlane.xlu0 %1001
        %v1003 = vrot.slane %v1002, 4
        %v1004 = vadd.f32 %v1002, %v1003
        %v1005 = vrot.slane %v1004, 2
        %v1006 = vadd.f32 %v1004, %v1005
        %v1007 = vrot.slane %v1006, 1
        %v1008 = vadd.f32 %v1006, %v1007
        %s1009 = vtos %v1008
        %v1010 = vsel %vm989, %v943, 0.0
        %1011 = vadd.xlane.f32.xlu0 %v1010
        %v1012 = vpop.xlane.xlu0 %1011
        %v1013 = vrot.slane %v1012, 4
        %v1014 = vadd.f32 %v1012, %v1013
        %v1015 = vrot.slane %v1014, 2
        %v1016 = vadd.f32 %v1014, %v1015
        %v1017 = vrot.slane %v1016, 1
        %v1018 = vadd.f32 %v1016, %v1017
        %s1019 = vtos %v1018
        %v1020 = vsel %vm989, %v988, 0.0
        %1021 = vadd.xlane.f32.xlu0 %v1020
        %v1022 = vpop.xlane.xlu0 %1021
        %v1023 = vrot.slane %v1022, 4
        %v1024 = vadd.f32 %v1022, %v1023
        %v1025 = vrot.slane %v1024, 2
        %v1026 = vadd.f32 %v1024, %v1025
        %v1027 = vrot.slane %v1026, 1
        %v1028 = vadd.f32 %v1026, %v1027
        %s1029 = vtos %v1028
        %v1030 = vlaneseq
        %v1031 = vand.u32 %v1030, 127
        %vm1032 = vcmp.eq.s32.totalorder %v1031, 0
        %s1033 = ssub.f32 %s999, %s1009
        %v1034 = vstv %s1033
        %v1035 = vsel %vm1032, %v1034, 0.0
        %v1036 = vadd.f32 %v1035, 0.0
        %vm1037 = vcmp.eq.s32.totalorder %v1031, 1
        %s1038 = ssub.f32 %s1009, %s1019
        %v1039 = vstv %s1038
        %v1040 = vsel %vm1037, %v1039, 0.0
        %v1041 = vadd.f32 %v1036, %v1040
        %vm1042 = vcmp.eq.s32.totalorder %v1031, 2
        %s1043 = ssub.f32 %s1019, %s1029
        %v1044 = vstv %s1043
        %v1045 = vsel %vm1042, %v1044, 0.0
        %v1046 = vadd.f32 %v1041, %v1045
        %1047 = vst [vmem:[%s325] sm:$0xff] %v1046
        %s1048 = sand.u32 %s152, 1
        %s1049 = scalar_lea.sflag [#allocation4], %s1048
        %s1050 = sand.u32 %s152, 1
        %s1051 = smul.addr %s1050, 64
        %s1052 = scalar_lea.vmem [#allocation7], %s1051
        %s1053 = sand.u32 %s180, 1
        %s1054 = scalar_lea.sflag [#allocation9], %s1053
        %s1055 = sand.u32 %s180, 1
        %s1056 = smul.addr %s1055, 8
        %s1057 = scalar_lea.vmem [#allocation8], %s1056
        // Predicated region
        $region45: #{tpu_custom_call.1} parent=35 // pred_check
          %p1058 = pneg %p162
        $region46: #{tpu_custom_call.1} parent=35 // pred_check_branch
          %1060 = sbr.rel (%p1058) target = $region48
        $region47: #{tpu_custom_call.1} parent=35 // pred_region
          %s1062 = ssub.s32 1024, 1024
          %1063 = vsyncadd %s1049, %s1062
          %s1064 = smul.addr %s33, 8
          %s1065 = sadd.s32 %s34, %s1064
          %s1066 = smul.addr %s1065, 128
          %s1067 = scalar_lea.hbm %s4, %s1066
          %s1068 = sshll.u32 %s1052, 4
          %s1069 = int_to_ptr.vmem [resolvable:$true] %s1068
          %1074 = dma.vmem_to_hbm [thread:$0]  %s1069, 1024, %s1067, %s1049, 128, 128, 8
        $region48: #{tpu_custom_call.1} parent=35 // pred_fallthru
          _
        // Predicated region
        $region49: #{tpu_custom_call.1} parent=35 // pred_check
          %p1075 = pneg %p190
        $region50: #{tpu_custom_call.1} parent=35 // pred_check_branch
          %1077 = sbr.rel (%p1075) target = $region52
        $region51: #{tpu_custom_call.1} parent=35 // pred_region
          %s1079 = ssub.s32 128, 128
          %1080 = vsyncadd %s1054, %s1079
          %s1081 = sadd.s32 %s34, %s33
          %s1082 = smul.addr %s1081, 128
          %s1083 = scalar_lea.hbm %s5, %s1082
          %s1085 = sshll.u32 %s1057, 4
          %s1086 = int_to_ptr.vmem [resolvable:$true] %s1085
          %1088 = dma.vmem_to_hbm [thread:$0]  %s1086, 128, %s1083, %s1054
        $region52: #{tpu_custom_call.1} parent=35 // pred_fallthru
          _
      $region36: #{tpu_custom_call.1} parent=5 // pred_fallthru
        _
      %p1089 = scmp.le.s32.totalorder 2, %s24
      // Predicated region
      $region53: #{tpu_custom_call.1} parent=5 // pred_check
        %p1090 = pneg %p1089
      $region54: #{tpu_custom_call.1} parent=5 // pred_check_branch
        %1092 = sbr.rel (%p1090) target = $region56
      $region55: #{tpu_custom_call.1} parent=5 // pred_region
        %s1093 = ssub.s32 %s24, 2
        // Predicated region
        $region57: #{tpu_custom_call.1} parent=55 // pred_check
          %p1094 = pneg %p168
        $region58: #{tpu_custom_call.1} parent=55 // pred_check_branch
          %1096 = sbr.rel (%p1094) target = $region60
        $region59: #{tpu_custom_call.1} parent=55 // pred_region
          %s1097 = sand.u32 %s153, 1
          %s1098 = scalar_lea.sflag [#allocation4], %s1097
          %s1099 = sand.u32 %s153, 1
          %s1100 = smul.addr %s1099, 64
          %s1101 = scalar_lea.vmem [#allocation7], %s1100
          %1102 = dma.done %s1098, 1024
        $region60: #{tpu_custom_call.1} parent=55 // pred_fallthru
          _
        // Predicated region
        $region61: #{tpu_custom_call.1} parent=55 // pred_check
          %p1103 = pneg %p196
        $region62: #{tpu_custom_call.1} parent=55 // pred_check_branch
          %1105 = sbr.rel (%p1103) target = $region64
        $region63: #{tpu_custom_call.1} parent=55 // pred_region
          %s1106 = sand.u32 %s181, 1
          %s1107 = scalar_lea.sflag [#allocation9], %s1106
          %s1108 = sand.u32 %s181, 1
          %s1109 = smul.addr %s1108, 8
          %s1110 = scalar_lea.vmem [#allocation8], %s1109
          %1111 = dma.done %s1107, 128
        $region64: #{tpu_custom_call.1} parent=55 // pred_fallthru
          _
      $region56: #{tpu_custom_call.1} parent=5 // pred_fallthru
        _
    $region6: #{tpu_custom_call.1} parent=1 // loop_footer
      %s28 = sadd.s32 1, %s24
    $region7: #{tpu_custom_call.1} parent=1 // loop_footer_branch
      %23 = sbr.rel target = $region3
    $region8: #{tpu_custom_call.1} parent=1 // loop_exit
      _
    %1112 = vsyncpa [#allocation3], 1
    %s1113 = scalar_lea.sflag [#allocation3], 1
    %1114 = vsyncpa %s1113, 1
    %1115 = vsyncpa [#allocation6], 1
    %s1116 = scalar_lea.sflag [#allocation6], 1
    %1117 = vsyncpa %s1116, 1
    %1118 = vsyncpa [#allocation4], 1
    %s1119 = scalar_lea.sflag [#allocation4], 1
    %1120 = vsyncpa %s1119, 1
    %1121 = vsyncpa [#allocation9], 1
    %s1122 = scalar_lea.sflag [#allocation9], 1
    %1123 = vsyncpa %s1122, 1

</llo_original>
